<compile_context>
chip_gen: v5e
topology: v5e:2x2
jax: 0.10.0
libtpu: 0.0.40
codegen_flags: <defaults>
</compile_context>

<pallas_src>
import functools

import jax
import jax.numpy as jnp
from jax.experimental import pallas as pl
from jax.experimental.pallas import tpu as pltpu

LANE = 128  # vreg lane width


def _round_up(v, m):
    return (v + m - 1) // m * m


def mlp_kernel(x_ref, w1_ref, b1_ref, w2_ref, b2_ref, w3_ref, b3_ref, o_ref):
    # x arrives in its HBM dtype (f32); the bf16 cast is free VPU work under a
    # DMA-bound pipeline (avoids a wrapper-side cast pass over x).
    x = x_ref[...].astype(w1_ref.dtype)
    # linear1 (bf16 operands -> MXU, f32 accumulation) + bias + ReLU in f32.
    h = jnp.dot(x, w1_ref[...], preferred_element_type=jnp.float32)
    h = jnp.maximum(h + b1_ref[...], 0.0)
    # linear2
    h = jnp.dot(h.astype(w2_ref.dtype), w2_ref[...], preferred_element_type=jnp.float32)
    h = jnp.maximum(h + b2_ref[...], 0.0)
    # dropout: identity at inference (eval mode).
    # TODO(synk): training-mode dropout (random mask + 1/(1-p) scale) not modeled here.
    # linear3 (output layer). Output features are NOT lane-padded, so no -inf masking
    # is needed and the writeback is exactly tile_b * D_out elements.
    logits = jnp.dot(h.astype(w3_ref.dtype), w3_ref[...], preferred_element_type=jnp.float32)
    logits = logits + b3_ref[...]
    # Numerically stable LogSoftmax over dim=1 (exp/log run on the otherwise-idle EUP).
    m = jnp.max(logits, axis=1, keepdims=True)
    z = logits - m
    lse = jnp.log(jnp.sum(jnp.exp(z), axis=1, keepdims=True))
    o_ref[...] = (z - lse).astype(o_ref.dtype)


def prepare_params(params):
    """One-time preprocessing (hoisted out of the per-call path).

    Lane-pads the hidden dims to multiples of 128 and casts weights to bf16.
    Zero-padding keeps the math identical: padded hidden units see zero weights and
    zero bias, ReLU(0) = 0, and the corresponding zero rows of the next weight
    contribute nothing.  Input (D_in) and output (D_out) feature dims are left
    unpadded (handled via full-extent BlockSpecs).
    """
    w1, b1 = params["w1"], params["b1"]
    w2, b2 = params["w2"], params["b2"]
    w3, b3 = params["w3"], params["b3"]
    D_in, H1 = w1.shape
    H2, D_out = w3.shape
    H1p = _round_up(H1, LANE)
    H2p = _round_up(H2, LANE)

    def pad2(a, r, c):
        return jnp.pad(a, ((0, r - a.shape[0]), (0, c - a.shape[1])))

    return dict(
        w1=pad2(w1, D_in, H1p).astype(jnp.bfloat16),   # K (D_in) left unpadded
        b1=pad2(b1, 1, H1p).astype(jnp.float32),
        w2=pad2(w2, H1p, H2p).astype(jnp.bfloat16),
        b2=pad2(b2, 1, H2p).astype(jnp.float32),
        w3=pad2(w3, H2p, D_out).astype(jnp.bfloat16),  # N (D_out) left unpadded
        b3=b3.astype(jnp.float32),
    )


def torch_mlp_forward(x, prepared, *, tile_b_max=256, target_grid_steps=4):
    """x: (B, D_in) f32. `prepared`: output of prepare_params (bf16 lane-padded
    weights, f32 biases). Returns (B, D_out) f32 log-probabilities."""
    B, D_in = x.shape
    w1, b1 = prepared["w1"], prepared["b1"]
    w2, b2 = prepared["w2"], prepared["b2"]
    w3, b3 = prepared["w3"], prepared["b3"]
    H1p, H2p, D_out = w1.shape[1], w2.shape[1], w3.shape[1]
    assert w1.shape[0] == D_in

    # Batch tile: multiple of 8 (f32 sublane), sized so the grid has several steps
    # (>= 2 lets v7x's two TensorCores split the batch axis and gives the software
    # pipeline something to overlap); capped modestly for v5e's scoped-VMEM / vst
    # limits.
    tile_b = max(8, min(_round_up(pl.cdiv(B, target_grid_steps), 8),
                        _round_up(tile_b_max, 8)))
    Bp = _round_up(B, tile_b)
    if Bp != B:
        # Only the ragged case pays for a batch pad; padded rows produce bias-only
        # log-softmax values that are sliced off below.
        x = jnp.pad(x, ((0, Bp - B), (0, 0)))
    grid = (Bp // tile_b,)

    const = lambda i: (0, 0)
    # Grid-invariant weights/biases: fetched once, single VMEM buffer (no pointless
    # double-buffering of constant-index blocks).
    wspec = lambda shape: pl.BlockSpec(shape, const, pipeline_mode=pl.Buffered(1))

    # Explicit VMEM budget from the actual footprint (single-buffered weights,
    # double-buffered x/out tiles, rough allowance for in-kernel f32 temporaries),
    # with 2x headroom, clamped well under every generation's physical VMEM.
    weight_bytes = (w1.size + w2.size + w3.size) * 2 + (b1.size + b2.size + b3.size) * 4
    io_bytes = 2 * tile_b * D_in * 4 + 2 * tile_b * D_out * 4
    scratch_bytes = 2 * tile_b * (H1p + H2p + D_out) * 4
    vmem_limit = int(min(48 * 1024 * 1024,
                         max(16 * 1024 * 1024,
                             2 * (weight_bytes + io_bytes + scratch_bytes))))

    flops = 2 * Bp * (D_in * H1p + H1p * H2p + H2p * D_out)
    cost = pl.CostEstimate(
        flops=flops,
        transcendentals=Bp * (D_out + 1),
        bytes_accessed=Bp * D_in * 4 + weight_bytes + Bp * D_out * 4,
    )

    out = pl.pallas_call(
        mlp_kernel,
        out_shape=jax.ShapeDtypeStruct((Bp, D_out), jnp.float32),
        grid=grid,
        in_specs=[
            pl.BlockSpec((tile_b, D_in), lambda i: (i, 0)),  # x: batch-tiled, full-width K
            wspec((D_in, H1p)),
            wspec((1, H1p)),
            wspec((H1p, H2p)),
            wspec((1, H2p)),
            wspec((H2p, D_out)),
            wspec((1, D_out)),
        ],
        out_specs=pl.BlockSpec((tile_b, D_out), lambda i: (i, 0)),
        compiler_params=pltpu.CompilerParams(
            dimension_semantics=("parallel",),
            vmem_limit_bytes=vmem_limit,
        ),
        cost_estimate=cost,
    )(x, w1, b1, w2, b2, w3, b3)

    return out[:B] if Bp != B else out


def init_linear(key, fan_in, fan_out):
    """Deterministic init mimicking torch.nn.Linear default: U(-1/sqrt(fan_in), +)."""
    kw, kb = jax.random.split(key)
    bound = 1.0 / jnp.sqrt(jnp.float32(fan_in))
    w = jax.random.uniform(kw, (fan_in, fan_out), jnp.float32, -bound, bound)
    b = jax.random.uniform(kb, (1, fan_out), jnp.float32, -bound, bound)
    return w, b


def ref_forward(x, params):
    """Pure-JAX reference using the same bf16-operand / f32-accumulation recipe.
    (A pure-f32 torch forward differs from this at roughly the 1e-2 relative level.)"""
    bf = jnp.bfloat16
    w1, b1 = params["w1"], params["b1"]
    w2, b2 = params["w2"], params["b2"]
    w3, b3 = params["w3"], params["b3"]
    h = jnp.maximum(
        jnp.dot(x.astype(bf), w1.astype(bf), preferred_element_type=jnp.float32) + b1, 0.0)
    h = jnp.maximum(
        jnp.dot(h.astype(bf), w2.astype(bf), preferred_element_type=jnp.float32) + b2, 0.0)
    logits = jnp.dot(h.astype(bf), w3.astype(bf), preferred_element_type=jnp.float32) + b3
    return jax.nn.log_softmax(logits, axis=1)


if __name__ == "__main__":
    # Shapes consistent with the module: batch=8, D_in=16, hidden=[32, 32], D_out=8
    B, D_in, H1, H2, D_out = 8, 16, 32, 32, 8

    key = jax.random.PRNGKey(0)
    kx, k1, k2, k3 = jax.random.split(key, 4)

    x = jax.random.normal(kx, (B, D_in), jnp.float32)
    w1, b1 = init_linear(k1, D_in, H1)
    w2, b2 = init_linear(k2, H1, H2)
    w3, b3 = init_linear(k3, H2, D_out)
    params = dict(w1=w1, b1=b1, w2=w2, b2=b2, w3=w3, b3=b3)

    # One-time weight prep (pad + bf16 cast) outside the per-call hot path.
    prepared = jax.tree_util.tree_map(jax.block_until_ready, prepare_params(params))

    fwd = jax.jit(torch_mlp_forward)

    out = jax.block_until_ready(fwd(x, prepared))
    ref = ref_forward(x, params)
    assert out.shape == (B, D_out)
    assert jnp.allclose(out, ref, atol=2e-3, rtol=2e-3), float(jnp.max(jnp.abs(out - ref)))

    # Second check: non-divisible batch exercising grid > 1 and batch padding.
    B2 = 100
    x2 = jax.random.normal(jax.random.PRNGKey(1), (B2, D_in), jnp.float32)
    out2 = jax.block_until_ready(fwd(x2, prepared))
    ref2 = ref_forward(x2, params)
    assert out2.shape == (B2, D_out)
    assert jnp.allclose(out2, ref2, atol=2e-3, rtol=2e-3), float(jnp.max(jnp.abs(out2 - ref2)))

    print("KERNEL_OK")
</pallas_src>

<mosaic_0001>
module attributes {stable_mosaic.version = 11 : i64} {
  func.func @mlp_kernel(%arg0: i32, %arg1: memref<8x16xf32, #tpu.memory_space<vmem>>, %arg2: memref<16x128xbf16, #tpu.memory_space<vmem>>, %arg3: memref<1x128xf32, #tpu.memory_space<vmem>>, %arg4: memref<128x128xbf16, #tpu.memory_space<vmem>>, %arg5: memref<1x128xf32, #tpu.memory_space<vmem>>, %arg6: memref<128x8xbf16, #tpu.memory_space<vmem>>, %arg7: memref<1x8xf32, #tpu.memory_space<vmem>>, %arg8: memref<8x8xf32, #tpu.memory_space<vmem>>) attributes {dimension_semantics = [#tpu.dimension_semantics<parallel>], iteration_bounds = array<i64: 1>, scalar_prefetch = 0 : i64, scratch_operands = 0 : i64, tpu.core_type = #tpu.core_type<tc>, window_params = [{transform_indices = @transform_0, window_bounds = array<i64: 8, 16>}, {pipeline_mode = #tpu.pipeline_mode<synchronous>, transform_indices = @transform_1, window_bounds = array<i64: 16, 128>}, {pipeline_mode = #tpu.pipeline_mode<synchronous>, transform_indices = @transform_2, window_bounds = array<i64: 1, 128>}, {pipeline_mode = #tpu.pipeline_mode<synchronous>, transform_indices = @transform_3, window_bounds = array<i64: 128, 128>}, {pipeline_mode = #tpu.pipeline_mode<synchronous>, transform_indices = @transform_4, window_bounds = array<i64: 1, 128>}, {pipeline_mode = #tpu.pipeline_mode<synchronous>, transform_indices = @transform_5, window_bounds = array<i64: 128, 8>}, {pipeline_mode = #tpu.pipeline_mode<synchronous>, transform_indices = @transform_6, window_bounds = array<i64: 1, 8>}, {transform_indices = @transform_7, window_bounds = array<i64: 8, 8>}]} {
    %c0 = arith.constant 0 : index
    %c0_0 = arith.constant 0 : index
    %0 = vector.load %arg1[%c0, %c0_0] : memref<8x16xf32, #tpu.memory_space<vmem>>, vector<8x16xf32>
    %1 = arith.truncf %0 : vector<8x16xf32> to vector<8x16xbf16>
    %c0_1 = arith.constant 0 : index
    %c0_2 = arith.constant 0 : index
    %2 = vector.load %arg2[%c0_1, %c0_2] : memref<16x128xbf16, #tpu.memory_space<vmem>>, vector<16x128xbf16>
    %cst = arith.constant dense<0.000000e+00> : vector<8x128xf32>
    %3 = tpu.matmul %1, %2, %cst {dimension_numbers = #tpu.dot_dimension_numbers<[1], [0], [0], [1], [0, 0, 1, 1], [], []>} : vector<8x16xbf16>, vector<16x128xbf16>, vector<8x128xf32> -> vector<8x128xf32>
    %c0_3 = arith.constant 0 : index
    %c0_4 = arith.constant 0 : index
    %4 = vector.load %arg3[%c0_3, %c0_4] : memref<1x128xf32, #tpu.memory_space<vmem>>, vector<1x128xf32>
    %5 = vector.broadcast %4 : vector<1x128xf32> to vector<8x128xf32>
    %6 = arith.addf %3, %5 : vector<8x128xf32>
    %cst_5 = arith.constant 0.000000e+00 : f32
    %7 = vector.broadcast %cst_5 : f32 to vector<8x128xf32>
    %8 = arith.maximumf %6, %7 : vector<8x128xf32>
    %9 = arith.truncf %8 : vector<8x128xf32> to vector<8x128xbf16>
    %c0_6 = arith.constant 0 : index
    %c0_7 = arith.constant 0 : index
    %10 = vector.load %arg4[%c0_6, %c0_7] : memref<128x128xbf16, #tpu.memory_space<vmem>>, vector<128x128xbf16>
    %cst_8 = arith.constant dense<0.000000e+00> : vector<8x128xf32>
    %11 = tpu.matmul %9, %10, %cst_8 {dimension_numbers = #tpu.dot_dimension_numbers<[1], [0], [0], [1], [0, 0, 1, 1], [], []>} : vector<8x128xbf16>, vector<128x128xbf16>, vector<8x128xf32> -> vector<8x128xf32>
    %c0_9 = arith.constant 0 : index
    %c0_10 = arith.constant 0 : index
    %12 = vector.load %arg5[%c0_9, %c0_10] : memref<1x128xf32, #tpu.memory_space<vmem>>, vector<1x128xf32>
    %13 = vector.broadcast %12 : vector<1x128xf32> to vector<8x128xf32>
    %14 = arith.addf %11, %13 : vector<8x128xf32>
    %cst_11 = arith.constant 0.000000e+00 : f32
    %15 = vector.broadcast %cst_11 : f32 to vector<8x128xf32>
    %16 = arith.maximumf %14, %15 : vector<8x128xf32>
    %17 = arith.truncf %16 : vector<8x128xf32> to vector<8x128xbf16>
    %c0_12 = arith.constant 0 : index
    %c0_13 = arith.constant 0 : index
    %18 = vector.load %arg6[%c0_12, %c0_13] : memref<128x8xbf16, #tpu.memory_space<vmem>>, vector<128x8xbf16>
    %cst_14 = arith.constant dense<0.000000e+00> : vector<8x8xf32>
    %19 = tpu.matmul %17, %18, %cst_14 {dimension_numbers = #tpu.dot_dimension_numbers<[1], [0], [0], [1], [0, 0, 1, 1], [], []>} : vector<8x128xbf16>, vector<128x8xbf16>, vector<8x8xf32> -> vector<8x8xf32>
    %c0_15 = arith.constant 0 : index
    %c0_16 = arith.constant 0 : index
    %20 = vector.load %arg7[%c0_15, %c0_16] : memref<1x8xf32, #tpu.memory_space<vmem>>, vector<1x8xf32>
    %21 = vector.broadcast %20 : vector<1x8xf32> to vector<8x8xf32>
    %22 = arith.addf %19, %21 : vector<8x8xf32>
    %cst_17 = arith.constant dense<0xFF800000> : vector<8xf32>
    %23 = vector.multi_reduction <maximumf>, %22, %cst_17 [1] : vector<8x8xf32> to vector<8xf32>
    %24 = vector.shape_cast %23 : vector<8xf32> to vector<8x1xf32>
    %25 = vector.broadcast %24 : vector<8x1xf32> to vector<8x8xf32>
    %26 = arith.subf %22, %25 : vector<8x8xf32>
    %27 = math.exp %26 : vector<8x8xf32>
    %cst_18 = arith.constant dense<0.000000e+00> : vector<8xf32>
    %28 = vector.multi_reduction <add>, %27, %cst_18 [1] : vector<8x8xf32> to vector<8xf32>
    %29 = vector.shape_cast %28 : vector<8xf32> to vector<8x1xf32>
    %30 = math.log %29 : vector<8x1xf32>
    %31 = vector.broadcast %30 : vector<8x1xf32> to vector<8x8xf32>
    %32 = arith.subf %26, %31 : vector<8x8xf32>
    %c0_19 = arith.constant 0 : index
    %c0_20 = arith.constant 0 : index
    %33 = vector.load %arg8[%c0_19, %c0_20] : memref<8x8xf32, #tpu.memory_space<vmem>>, vector<8x8xf32>
    tpu.vector_store %arg8[%c0_19, %c0_20], %32 {strides = array<i32>} : memref<8x8xf32, #tpu.memory_space<vmem>>, vector<8x8xf32>,
    return
  }
  func.func @transform_0(%arg0: i32) -> (i32, i32) {
    %c0_i32 = arith.constant 0 : i32
    %c0_i32_0 = arith.constant 0 : i32
    return %arg0, %c0_i32 : i32, i32
  }
  func.func @transform_1(%arg0: i32) -> (i32, i32) {
    %c0_i32 = arith.constant 0 : i32
    %c0_i32_0 = arith.constant 0 : i32
    %c0_i32_1 = arith.constant 0 : i32
    return %c0_i32, %c0_i32_0 : i32, i32
  }
  func.func @transform_2(%arg0: i32) -> (i32, i32) {
    %c0_i32 = arith.constant 0 : i32
    %c0_i32_0 = arith.constant 0 : i32
    %c0_i32_1 = arith.constant 0 : i32
    return %c0_i32, %c0_i32_0 : i32, i32
  }
  func.func @transform_3(%arg0: i32) -> (i32, i32) {
    %c0_i32 = arith.constant 0 : i32
    %c0_i32_0 = arith.constant 0 : i32
    %c0_i32_1 = arith.constant 0 : i32
    return %c0_i32, %c0_i32_0 : i32, i32
  }
  func.func @transform_4(%arg0: i32) -> (i32, i32) {
    %c0_i32 = arith.constant 0 : i32
    %c0_i32_0 = arith.constant 0 : i32
    %c0_i32_1 = arith.constant 0 : i32
    return %c0_i32, %c0_i32_0 : i32, i32
  }
  func.func @transform_5(%arg0: i32) -> (i32, i32) {
    %c0_i32 = arith.constant 0 : i32
    %c0_i32_0 = arith.constant 0 : i32
    %c0_i32_1 = arith.constant 0 : i32
    return %c0_i32, %c0_i32_0 : i32, i32
  }
  func.func @transform_6(%arg0: i32) -> (i32, i32) {
    %c0_i32 = arith.constant 0 : i32
    %c0_i32_0 = arith.constant 0 : i32
    %c0_i32_1 = arith.constant 0 : i32
    return %c0_i32, %c0_i32_0 : i32, i32
  }
  func.func @transform_7(%arg0: i32) -> (i32, i32) {
    %c0_i32 = arith.constant 0 : i32
    %c0_i32_0 = arith.constant 0 : i32
    return %arg0, %c0_i32 : i32, i32
  }
}

</mosaic_0001>

<llo_original>
// kernel: torch_mlp_forward.1
$region0: #{torch_mlp_forward.1}
  #allocation0 [shape = 'u32[]', space=smem, size = 0x4, offset = 0x4, fixed_abs, tag = 'smem constant byte address 0x4 - core index']
  #allocation1 [shape = 'u32[72,128]{1,0:T(1,128)}', space=vmem, size = 0x9000, scoped, tag = 'internal scratch']
  %s0 = inlined_call_operand.vmem [shape: f32[8,16], index: 0, kind: input, shape index: {}]
  %s1 = inlined_call_operand.hbm [shape: bf16[16,128], index: 1, kind: input, shape index: {}]
  %s2 = inlined_call_operand.hbm [shape: f32[1,128], index: 2, kind: input, shape index: {}]
  %s3 = inlined_call_operand.vmem [shape: bf16[128,128], index: 3, kind: input, shape index: {}]
  %s4 = inlined_call_operand.hbm [shape: f32[1,128], index: 4, kind: input, shape index: {}]
  %s5 = inlined_call_operand.vmem [shape: bf16[128,8], index: 5, kind: input, shape index: {}]
  %s6 = inlined_call_operand.hbm [shape: f32[1,8], index: 6, kind: input, shape index: {}]
  %s7 = inlined_call_operand.hbm [shape: f32[8,8], index: 7, kind: output, shape index: {}]
  %s8 = sld [smem:[#allocation0]]
  $region54: #{torch_mlp_forward.1} parent=0
    _
  %s10 = ssub.s32 1, %s8
  %s11 = scalar_select 0, %s10, %s8
  $region1: #{torch_mlp_forward.1} parent=0
    #allocation2 [shape = 'u8[4096]{0}', space=vmem, size = 0x1000, scoped, tag = 'input window, operand 1, single buffered']
    #allocation3 [shape = 's32[1]{0}', space=sflag, size = 0x4, scoped, tag = 'scoped memory for torch_mlp_forward.1']
    #allocation4 [shape = 's32[1]{0}', space=sflag, size = 0x4, scoped, tag = 'scoped memory for torch_mlp_forward.1']
    #allocation5 [shape = 'u8[512]{0}', space=vmem, size = 0x400, scoped, tag = 'input window, operand 2, single buffered']
    #allocation6 [shape = 's32[1]{0}', space=sflag, size = 0x4, scoped, tag = 'scoped memory for torch_mlp_forward.1']
    #allocation7 [shape = 'u8[512]{0}', space=vmem, size = 0x400, scoped, tag = 'input window, operand 4, single buffered']
    #allocation8 [shape = 'u8[512]{0}', space=vmem, size = 0x400, scoped, tag = 'input window, operand 6, single buffered']
    #allocation9 [shape = 's32[1]{0}', space=sflag, size = 0x4, scoped, tag = 'scoped memory for torch_mlp_forward.1']
    #allocation10 [shape = 'u8[4096]{0}', space=vmem, size = 0x1000, scoped, tag = 'output window, operand 0, single buffered']
    %12 = vsyncpa [#allocation3], 0
    %13 = vsyncpa [#allocation6], 0
    %14 = vsyncpa [#allocation9], 0
    %15 = vsyncpa [#allocation4], 0
    // Predicated region
    $region2: #{torch_mlp_forward.1} parent=1 // pred_check
      _
    $region3: #{torch_mlp_forward.1} parent=1 // pred_check_branch
      %17 = sbr.rel (0) target = $region5
    $region4: #{torch_mlp_forward.1} parent=1 // pred_region
      _
    $region5: #{torch_mlp_forward.1} parent=1 // pred_fallthru
      _
    // Predicated region
    $region6: #{torch_mlp_forward.1} parent=1 // pred_check
      _
    $region7: #{torch_mlp_forward.1} parent=1 // pred_check_branch
      %19 = sbr.rel (0) target = $region9
    $region8: #{torch_mlp_forward.1} parent=1 // pred_region
      %21 = vsyncadd [#allocation3], 0
      %s22 = sshll.u32 %s1, 4
      %s23 = int_to_ptr.hbm [resolvable:$true] %s22
      %s24 = sshll.u32 [#allocation2], 4
      %s25 = int_to_ptr.vmem [resolvable:$true] %s24
      %30 = dma.hbm_to_vmem [thread:$0]  %s23, 128, %s25, [#allocation3], 64, 64, 4
    $region9: #{torch_mlp_forward.1} parent=1 // pred_fallthru
      _
    // Predicated region
    $region10: #{torch_mlp_forward.1} parent=1 // pred_check
      _
    $region11: #{torch_mlp_forward.1} parent=1 // pred_check_branch
      %32 = sbr.rel (0) target = $region13
    $region12: #{torch_mlp_forward.1} parent=1 // pred_region
      %34 = vsyncadd [#allocation6], 0
      %s36 = sshll.u32 %s2, 4
      %s37 = int_to_ptr.hbm [resolvable:$true] %s36
      %s38 = sshll.u32 [#allocation5], 4
      %s39 = int_to_ptr.vmem [resolvable:$true] %s38
      %41 = dma.hbm_to_vmem [thread:$0]  %s37, 16, %s39, [#allocation6]
    $region13: #{torch_mlp_forward.1} parent=1 // pred_fallthru
      _
    // Predicated region
    $region14: #{torch_mlp_forward.1} parent=1 // pred_check
      _
    $region15: #{torch_mlp_forward.1} parent=1 // pred_check_branch
      %43 = sbr.rel (0) target = $region17
    $region16: #{torch_mlp_forward.1} parent=1 // pred_region
      _
    $region17: #{torch_mlp_forward.1} parent=1 // pred_fallthru
      _
    // Predicated region
    $region18: #{torch_mlp_forward.1} parent=1 // pred_check
      _
    $region19: #{torch_mlp_forward.1} parent=1 // pred_check_branch
      %45 = sbr.rel (0) target = $region21
    $region20: #{torch_mlp_forward.1} parent=1 // pred_region
      %47 = vsyncadd [#allocation6], 0
      %s49 = sshll.u32 %s4, 4
      %s50 = int_to_ptr.hbm [resolvable:$true] %s49
      %s51 = sshll.u32 [#allocation7], 4
      %s52 = int_to_ptr.vmem [resolvable:$true] %s51
      %54 = dma.hbm_to_vmem [thread:$0]  %s50, 16, %s52, [#allocation6]
    $region21: #{torch_mlp_forward.1} parent=1 // pred_fallthru
      _
    // Predicated region
    $region22: #{torch_mlp_forward.1} parent=1 // pred_check
      _
    $region23: #{torch_mlp_forward.1} parent=1 // pred_check_branch
      %56 = sbr.rel (0) target = $region25
    $region24: #{torch_mlp_forward.1} parent=1 // pred_region
      _
    $region25: #{torch_mlp_forward.1} parent=1 // pred_fallthru
      _
    // Predicated region
    $region26: #{torch_mlp_forward.1} parent=1 // pred_check
      _
    $region27: #{torch_mlp_forward.1} parent=1 // pred_check_branch
      %58 = sbr.rel (0) target = $region29
    $region28: #{torch_mlp_forward.1} parent=1 // pred_region
      %60 = vsyncadd [#allocation9], 0
      %s62 = sshll.u32 %s6, 4
      %s63 = int_to_ptr.hbm [resolvable:$true] %s62
      %s64 = sshll.u32 [#allocation8], 4
      %s65 = int_to_ptr.vmem [resolvable:$true] %s64
      %67 = dma.hbm_to_vmem [thread:$0]  %s63, 16, %s65, [#allocation9]
    $region29: #{torch_mlp_forward.1} parent=1 // pred_fallthru
      _
    // Predicated region
    $region30: #{torch_mlp_forward.1} parent=1 // pred_check
      _
    $region31: #{torch_mlp_forward.1} parent=1 // pred_check_branch
      %69 = sbr.rel (0) target = $region33
    $region32: #{torch_mlp_forward.1} parent=1 // pred_region
      %71 = dma.done [#allocation3], 128
    $region33: #{torch_mlp_forward.1} parent=1 // pred_fallthru
      _
    // Predicated region
    $region34: #{torch_mlp_forward.1} parent=1 // pred_check
      _
    $region35: #{torch_mlp_forward.1} parent=1 // pred_check_branch
      %73 = sbr.rel (0) target = $region37
    $region36: #{torch_mlp_forward.1} parent=1 // pred_region
      %75 = dma.done [#allocation6], 16
    $region37: #{torch_mlp_forward.1} parent=1 // pred_fallthru
      _
    // Predicated region
    $region38: #{torch_mlp_forward.1} parent=1 // pred_check
      _
    $region39: #{torch_mlp_forward.1} parent=1 // pred_check_branch
      %77 = sbr.rel (0) target = $region41
    $region40: #{torch_mlp_forward.1} parent=1 // pred_region
      %79 = dma.done [#allocation6], 16
    $region41: #{torch_mlp_forward.1} parent=1 // pred_fallthru
      _
    // Predicated region
    $region42: #{torch_mlp_forward.1} parent=1 // pred_check
      _
    $region43: #{torch_mlp_forward.1} parent=1 // pred_check_branch
      %81 = sbr.rel (0) target = $region45
    $region44: #{torch_mlp_forward.1} parent=1 // pred_region
      %83 = dma.done [#allocation9], 16
    $region45: #{torch_mlp_forward.1} parent=1 // pred_fallthru
      _
    %v85 = vld [vmem:[%s0] sm:$0xff]
    %v86 = vpack.c.bf16 %v85, %v85
    %v87 = vld [vmem:[#allocation2] sm:$0xf]
    %v88 = vld [vmem:[#allocation2 + $0x4] sm:$0xf]
    %v89 = vld [vmem:[#allocation5] sm:$0x1]
    %v91 = vperm.slane %v89, 0
    %v95 = vunpack.c.l.b16 %v87
    %v96 = vunpack.c.l.b16 %v88
    %v97 = vpack.c.b16 %v96, %v95
    %vm99 = vcmask 130048
    %v101 = vsel %vm99, %v86, 0
    %103 = vmatpush.bf16.msra.mxu0 0
    %104 = vmatpush.bf16.msra.mxu0 0
    %105 = vmatpush.bf16.msra.mxu0 0
    %106 = vmatpush.bf16.msra.mxu0 0
    %107 = vmatpush.bf16.msra.mxu0 0
    %108 = vmatpush.bf16.msra.mxu0 0
    %109 = vmatpush.bf16.msra.mxu0 0
    %110 = vmatpush.bf16.msra.mxu0 %v97
    %111 = vmatmul.bf16.gmra.mxu0 %v101
    %v112 = vpop.f32.mrf.mxu0
    %v113 = vadd.f32 %v91, %v112
    %v114 = vpop.f32.mrf.mxu0
    %115 = vdwg.mxu0
    %v116 = vmax.f32 %v113, 0.0
    %v117 = vpack.c.bf16 %v116, %v116
    %v118 = vld [vmem:[%s3] sm:$0xf]
    %v119 = vld [vmem:[%s3 + $0x4] sm:$0xf]
    %v120 = vld [vmem:[%s3 + $0x8] sm:$0xf]
    %v121 = vld [vmem:[%s3 + $0xc] sm:$0xf]
    %v122 = vld [vmem:[%s3 + $0x10] sm:$0xf]
    %v123 = vld [vmem:[%s3 + $0x14] sm:$0xf]
    %v124 = vld [vmem:[%s3 + $0x18] sm:$0xf]
    %v125 = vld [vmem:[%s3 + $0x1c] sm:$0xf]
    %v126 = vld [vmem:[%s3 + $0x20] sm:$0xf]
    %v127 = vld [vmem:[%s3 + $0x24] sm:$0xf]
    %v128 = vld [vmem:[%s3 + $0x28] sm:$0xf]
    %v129 = vld [vmem:[%s3 + $0x2c] sm:$0xf]
    %v130 = vld [vmem:[%s3 + $0x30] sm:$0xf]
    %v131 = vld [vmem:[%s3 + $0x34] sm:$0xf]
    %v132 = vld [vmem:[%s3 + $0x38] sm:$0xf]
    %v133 = vld [vmem:[%s3 + $0x3c] sm:$0xf]
    %v134 = vld [vmem:[#allocation7] sm:$0x1]
    %v136 = vperm.slane %v134, 0
    %v154 = vunpack.c.l.b16 %v118
    %v155 = vunpack.c.l.b16 %v119
    %v156 = vunpack.c.l.b16 %v120
    %v157 = vunpack.c.l.b16 %v121
    %v158 = vunpack.c.l.b16 %v122
    %v159 = vunpack.c.l.b16 %v123
    %v160 = vunpack.c.l.b16 %v124
    %v161 = vunpack.c.l.b16 %v125
    %v162 = vunpack.c.l.b16 %v126
    %v163 = vunpack.c.l.b16 %v127
    %v164 = vunpack.c.l.b16 %v128
    %v165 = vunpack.c.l.b16 %v129
    %v166 = vunpack.c.l.b16 %v130
    %v167 = vunpack.c.l.b16 %v131
    %v168 = vunpack.c.l.b16 %v132
    %v169 = vunpack.c.l.b16 %v133
    %v170 = vpack.c.b16 %v155, %v154
    %v171 = vpack.c.b16 %v157, %v156
    %v172 = vpack.c.b16 %v159, %v158
    %v173 = vpack.c.b16 %v161, %v160
    %v174 = vpack.c.b16 %v163, %v162
    %v175 = vpack.c.b16 %v165, %v164
    %v176 = vpack.c.b16 %v167, %v166
    %v177 = vpack.c.b16 %v169, %v168
    %186 = vmatpush.bf16.msra.mxu0 %v177
    %187 = vmatpush.bf16.msra.mxu0 %v176
    %188 = vmatpush.bf16.msra.mxu0 %v175
    %189 = vmatpush.bf16.msra.mxu0 %v174
    %190 = vmatpush.bf16.msra.mxu0 %v173
    %191 = vmatpush.bf16.msra.mxu0 %v172
    %192 = vmatpush.bf16.msra.mxu0 %v171
    %193 = vmatpush.bf16.msra.mxu0 %v170
    %194 = vmatmul.bf16.gmra.mxu0 %v117
    %v195 = vpop.f32.mrf.mxu0
    %v196 = vadd.f32 %v136, %v195
    %v197 = vpop.f32.mrf.mxu0
    %198 = vdwg.mxu0
    %v199 = vmax.f32 %v196, 0.0
    %v200 = vpack.c.bf16 %v199, %v199
    %v201 = vld [vmem:[%s5] sm:$0xf]
    %v202 = vld [vmem:[%s5 + $0x4] sm:$0xf]
    %v203 = vld [vmem:[%s5 + $0x8] sm:$0xf]
    %v204 = vld [vmem:[%s5 + $0xc] sm:$0xf]
    %v205 = vld [vmem:[%s5 + $0x10] sm:$0xf]
    %v206 = vld [vmem:[%s5 + $0x14] sm:$0xf]
    %v207 = vld [vmem:[%s5 + $0x18] sm:$0xf]
    %v208 = vld [vmem:[%s5 + $0x1c] sm:$0xf]
    %v209 = vld [vmem:[%s5 + $0x20] sm:$0xf]
    %v210 = vld [vmem:[%s5 + $0x24] sm:$0xf]
    %v211 = vld [vmem:[%s5 + $0x28] sm:$0xf]
    %v212 = vld [vmem:[%s5 + $0x2c] sm:$0xf]
    %v213 = vld [vmem:[%s5 + $0x30] sm:$0xf]
    %v214 = vld [vmem:[%s5 + $0x34] sm:$0xf]
    %v215 = vld [vmem:[%s5 + $0x38] sm:$0xf]
    %v216 = vld [vmem:[%s5 + $0x3c] sm:$0xf]
    %v217 = vld [vmem:[#allocation8] sm:$0x1]
    %v219 = vperm.slane %v217, 0
    %v237 = vunpack.c.l.b16 %v201
    %v238 = vunpack.c.l.b16 %v202
    %v239 = vunpack.c.l.b16 %v203
    %v240 = vunpack.c.l.b16 %v204
    %v241 = vunpack.c.l.b16 %v205
    %v242 = vunpack.c.l.b16 %v206
    %v243 = vunpack.c.l.b16 %v207
    %v244 = vunpack.c.l.b16 %v208
    %v245 = vunpack.c.l.b16 %v209
    %v246 = vunpack.c.l.b16 %v210
    %v247 = vunpack.c.l.b16 %v211
    %v248 = vunpack.c.l.b16 %v212
    %v249 = vunpack.c.l.b16 %v213
    %v250 = vunpack.c.l.b16 %v214
    %v251 = vunpack.c.l.b16 %v215
    %v252 = vunpack.c.l.b16 %v216
    %v253 = vpack.c.b16 %v238, %v237
    %v254 = vpack.c.b16 %v240, %v239
    %v255 = vpack.c.b16 %v242, %v241
    %v256 = vpack.c.b16 %v244, %v243
    %v257 = vpack.c.b16 %v246, %v245
    %v258 = vpack.c.b16 %v248, %v247
    %v259 = vpack.c.b16 %v250, %v249
    %v260 = vpack.c.b16 %v252, %v251
    %269 = vmatpush.bf16.msra.mxu0 %v260
    %270 = vmatpush.bf16.msra.mxu0 %v259
    %271 = vmatpush.bf16.msra.mxu0 %v258
    %272 = vmatpush.bf16.msra.mxu0 %v257
    %273 = vmatpush.bf16.msra.mxu0 %v256
    %274 = vmatpush.bf16.msra.mxu0 %v255
    %275 = vmatpush.bf16.msra.mxu0 %v254
    %276 = vmatpush.bf16.msra.mxu0 %v253
    %277 = vmatmul.bf16.gmra.mxu0 %v200
    %v278 = vpop.f32.mrf.mxu0
    %v279 = vadd.f32 %v219, %v278
    %v280 = vpop.f32.mrf.mxu0
    %281 = vdwg.mxu0
    %vm282 = vcmask 64512
    %v283 = vsel %vm282, %v279, -inf
    %284 = vmax.xlane.f32.xlu0 %v283
    %v285 = vpop.xlane.xlu0 %284
    %v286 = vsub.f32 %v279, %v285
    %v287 = vmul.f32 %v286, 1.442695
    %v288 = vpow.pop %v287
    %v289 = vsel %vm282, %v288, 0.0
    %290 = vadd.xlane.f32.xlu0 %v289
    %v291 = vpop.xlane.xlu0 %290
    %v292 = vlog2.pop %v291
    %v293 = vmul.f32 %v292, 0.6931472
    %v294 = vsub.f32 %v286, %v293
    %295 = vst.msk [vmem:[#allocation10] sm:$0xff] %vm282, %v294
    // Predicated region
    $region46: #{torch_mlp_forward.1} parent=1 // pred_check
      _
    $region47: #{torch_mlp_forward.1} parent=1 // pred_check_branch
      %297 = sbr.rel (0) target = $region49
    $region48: #{torch_mlp_forward.1} parent=1 // pred_region
      %299 = vsyncadd [#allocation4], 0
      %s301 = sshll.u32 [#allocation10], 4
      %s302 = int_to_ptr.vmem [resolvable:$true] %s301
      %s303 = sshll.u32 %s7, 4
      %s304 = int_to_ptr.hbm [resolvable:$true] %s303
      %306 = dma.vmem_to_hbm [thread:$0]  %s302, 128, %s304, [#allocation4]
    $region49: #{torch_mlp_forward.1} parent=1 // pred_fallthru
      _
    // Predicated region
    $region50: #{torch_mlp_forward.1} parent=1 // pred_check
      _
    $region51: #{torch_mlp_forward.1} parent=1 // pred_check_branch
      %308 = sbr.rel (0) target = $region53
    $region52: #{torch_mlp_forward.1} parent=1 // pred_region
      %310 = dma.done [#allocation4], 128
    $region53: #{torch_mlp_forward.1} parent=1 // pred_fallthru
      _
    %311 = vsyncpa [#allocation3], 1
    %312 = vsyncpa [#allocation6], 1
    %313 = vsyncpa [#allocation9], 1
    %314 = vsyncpa [#allocation4], 1

</llo_original>
